<compile_context>
chip_gen: v7x
topology: tpu7x:2x2x1
jax: 0.10.0
libtpu: 0.0.40
codegen_flags: <defaults>
</compile_context>

<pallas_src>
import functools

import jax
import jax.numpy as jnp
from jax.experimental import pallas as pl
from jax.experimental.pallas import tpu as pltpu

_LANE = 128
_SUBLANE = 8


def _round_up(x, m):
    return ((x + m - 1) // m) * m


def _linear_kernel(h_ref, w_ref, b_ref, o_ref):
    # MXU matmul with f32 accumulation; bias added on the f32 accumulator
    # (keeps the VPU add in f32 — safe on v5e which has no bf16 VPU).
    acc = jnp.dot(h_ref[...], w_ref[...], preferred_element_type=jnp.float32)
    o_ref[...] = (acc + b_ref[...]).astype(o_ref.dtype)


@functools.partial(jax.jit, static_argnames=("block_b", "compute_dtype"))
def output_nn_forward(h, w_t, b, *, block_b=512, compute_dtype=jnp.float32):
    """Linear layer: h @ w_t + b.

    h   : [B, n_latent]            (feature axis last -> TPU lanes)
    w_t : [n_latent, input_dim]    (transposed nn.Linear weight)
    b   : [input_dim]
    returns [B, input_dim] in h.dtype
    """
    B, K = h.shape
    K2, N = w_t.shape
    assert K == K2
    out_dtype = h.dtype

    # ---- lane-dense output: pad feature dim up to a multiple of 128 ----------
    n_pad = _round_up(max(N, _LANE), _LANE)
    w_p = jnp.zeros((K, n_pad), compute_dtype).at[:, :N].set(w_t.astype(compute_dtype))
    b_p = jnp.zeros((1, n_pad), jnp.float32).at[:, :N].set(
        b.astype(jnp.float32).reshape(1, N)
    )

    # ---- batch tiling: pad B to a multiple of the batch tile ------------------
    tm = min(block_b, _round_up(B, _SUBLANE))
    b_pad = _round_up(B, tm)
    h_c = h.astype(compute_dtype)
    if b_pad != B:
        h_c = jnp.pad(h_c, ((0, b_pad - B), (0, 0)))

    grid = (b_pad // tm,)
    itemsize = jnp.dtype(compute_dtype).itemsize
    cost = pl.CostEstimate(
        flops=2 * B * K * N,
        transcendentals=0,
        bytes_accessed=itemsize * (B * K + K * N) + jnp.dtype(out_dtype).itemsize * B * N,
    )

    out_padded = pl.pallas_call(
        _linear_kernel,
        out_shape=jax.ShapeDtypeStruct((b_pad, n_pad), out_dtype),
        grid_spec=pltpu.PrefetchScalarGridSpec(
            num_scalar_prefetch=0,
            grid=grid,
            in_specs=[
                # h: streamed over the batch grid (double-buffered by BlockSpec).
                pl.BlockSpec((tm, K), lambda i: (i, 0),
                             memory_space=pltpu.MemorySpace.VMEM),
                # weight / bias: VMEM-resident, same block every grid step.
                pl.BlockSpec((K, n_pad), lambda i: (0, 0),
                             memory_space=pltpu.MemorySpace.VMEM),
                pl.BlockSpec((1, n_pad), lambda i: (0, 0),
                             memory_space=pltpu.MemorySpace.VMEM),
            ],
            out_specs=pl.BlockSpec((tm, n_pad), lambda i: (i, 0),
                                   memory_space=pltpu.MemorySpace.VMEM),
        ),
        compiler_params=pltpu.CompilerParams(
            dimension_semantics=("parallel",),   # megacore sharding on v7x
        ),
        cost_estimate=cost,
    )(h_c, w_p, b_p)

    # Slice the lane/row padding off outside the kernel (cheap XLA slice).
    return out_padded[:B, :N]


if __name__ == "__main__":
    # Module defaults: input_dim=2, n_latent=128. Small batch of 8.
    input_dim = 2
    n_latent = 128
    batch = 8

    key = jax.random.PRNGKey(0)
    k_h, k_w, k_b = jax.random.split(key, 3)

    # Deterministic synthetic params (mimic nn.Linear uniform(-1/sqrt(K), 1/sqrt(K)))
    bound = 1.0 / jnp.sqrt(jnp.float32(n_latent))
    W = jax.random.uniform(k_w, (input_dim, n_latent), jnp.float32, -bound, bound)
    b = jax.random.uniform(k_b, (input_dim,), jnp.float32, -bound, bound)
    h = jax.random.normal(k_h, (batch, n_latent), jnp.float32)

    ref = h @ W.T + b  # plain-JAX reference of the PyTorch forward (no sigmoid)

    # f32 path (exact check)
    out = output_nn_forward(h, W.T, b, compute_dtype=jnp.float32)
    out = jax.block_until_ready(out)
    assert out.shape == (batch, input_dim)
    assert jnp.allclose(out, ref, atol=1e-5, rtol=1e-5)

    # bf16 streaming path (halves the dominant HBM traffic; f32 MXU accumulate)
    out_bf16 = output_nn_forward(h, W.T, b, compute_dtype=jnp.bfloat16)
    out_bf16 = jax.block_until_ready(out_bf16)
    assert out_bf16.shape == (batch, input_dim)
    assert jnp.allclose(out_bf16, ref, atol=5e-2, rtol=5e-2)

    print("KERNEL_OK")
</pallas_src>

<mosaic_0001>
module attributes {stable_mosaic.version = 11 : i64} {
  func.func @_linear_kernel(%arg0: i32, %arg1: memref<8x128xf32, #tpu.memory_space<vmem>>, %arg2: memref<128x128xf32, #tpu.memory_space<vmem>>, %arg3: memref<1x128xf32, #tpu.memory_space<vmem>>, %arg4: memref<8x128xf32, #tpu.memory_space<vmem>>) attributes {dimension_semantics = [#tpu.dimension_semantics<parallel>], iteration_bounds = array<i64: 1>, scalar_prefetch = 0 : i64, scratch_operands = 0 : i64, tpu.core_type = #tpu.core_type<tc>, window_params = [{transform_indices = @transform_0, window_bounds = array<i64: 8, 128>}, {pipeline_mode = #tpu.pipeline_mode<synchronous>, transform_indices = @transform_1, window_bounds = array<i64: 128, 128>}, {pipeline_mode = #tpu.pipeline_mode<synchronous>, transform_indices = @transform_2, window_bounds = array<i64: 1, 128>}, {transform_indices = @transform_3, window_bounds = array<i64: 8, 128>}]} {
    %c0 = arith.constant 0 : index
    %c0_0 = arith.constant 0 : index
    %0 = vector.load %arg1[%c0, %c0_0] : memref<8x128xf32, #tpu.memory_space<vmem>>, vector<8x128xf32>
    %c0_1 = arith.constant 0 : index
    %c0_2 = arith.constant 0 : index
    %1 = vector.load %arg2[%c0_1, %c0_2] : memref<128x128xf32, #tpu.memory_space<vmem>>, vector<128x128xf32>
    %cst = arith.constant dense<0.000000e+00> : vector<8x128xf32>
    %2 = tpu.matmul %0, %1, %cst {dimension_numbers = #tpu.dot_dimension_numbers<[1], [0], [0], [1], [0, 0, 1, 1], [], []>} : vector<8x128xf32>, vector<128x128xf32>, vector<8x128xf32> -> vector<8x128xf32>
    %c0_3 = arith.constant 0 : index
    %c0_4 = arith.constant 0 : index
    %3 = vector.load %arg3[%c0_3, %c0_4] : memref<1x128xf32, #tpu.memory_space<vmem>>, vector<1x128xf32>
    %4 = vector.broadcast %3 : vector<1x128xf32> to vector<8x128xf32>
    %5 = arith.addf %2, %4 : vector<8x128xf32>
    %c0_5 = arith.constant 0 : index
    %c0_6 = arith.constant 0 : index
    %6 = vector.load %arg4[%c0_5, %c0_6] : memref<8x128xf32, #tpu.memory_space<vmem>>, vector<8x128xf32>
    tpu.vector_store %arg4[%c0_5, %c0_6], %5 {strides = array<i32>} : memref<8x128xf32, #tpu.memory_space<vmem>>, vector<8x128xf32>,
    return
  }
  func.func @transform_0(%arg0: i32) -> (i32, i32) {
    %c0_i32 = arith.constant 0 : i32
    %c0_i32_0 = arith.constant 0 : i32
    return %arg0, %c0_i32 : i32, i32
  }
  func.func @transform_1(%arg0: i32) -> (i32, i32) {
    %c0_i32 = arith.constant 0 : i32
    %c0_i32_0 = arith.constant 0 : i32
    %c0_i32_1 = arith.constant 0 : i32
    return %c0_i32, %c0_i32_0 : i32, i32
  }
  func.func @transform_2(%arg0: i32) -> (i32, i32) {
    %c0_i32 = arith.constant 0 : i32
    %c0_i32_0 = arith.constant 0 : i32
    %c0_i32_1 = arith.constant 0 : i32
    return %c0_i32, %c0_i32_0 : i32, i32
  }
  func.func @transform_3(%arg0: i32) -> (i32, i32) {
    %c0_i32 = arith.constant 0 : i32
    %c0_i32_0 = arith.constant 0 : i32
    return %arg0, %c0_i32 : i32, i32
  }
}

</mosaic_0001>

<llo_original>
// kernel: output_nn_forward.1
$region0: #{output_nn_forward.1}
  #allocation0 [shape = 'u32[]', space=smem, size = 0x4, offset = 0x4, fixed_abs, tag = 'smem constant byte address 0x4 - core index']
  #allocation1 [shape = 'u32[144,128]{1,0:T(1,128)}', space=vmem, size = 0x12000, scoped, tag = 'internal scratch']
  %s0 = inlined_call_operand.vmem [shape: f32[8,128], index: 0, kind: input, shape index: {}]
  %s1 = inlined_call_operand.vmem [shape: f32[128,128], index: 1, kind: input, shape index: {}]
  %s2 = inlined_call_operand.vmem [shape: f32[1,128], index: 2, kind: input, shape index: {}]
  %s3 = inlined_call_operand.vmem [shape: f32[8,128], index: 3, kind: output, shape index: {}]
  %s4 = sld [smem:[#allocation0]]
  $region22: #{output_nn_forward.1} parent=0
    _
  %s6 = ssub.s32 1, %s4
  %s7 = scalar_select 0, %s6, %s4
  // Predicated region
  $region2: #{output_nn_forward.1} parent=0 // pred_check
    _
  $region3: #{output_nn_forward.1} parent=0 // pred_check_branch
    %9 = sbr.rel (0) target = $region5
  $region4: #{output_nn_forward.1} parent=0 // pred_region
    _
  $region5: #{output_nn_forward.1} parent=0 // pred_fallthru
    _
  // Predicated region
  $region6: #{output_nn_forward.1} parent=0 // pred_check
    _
  $region7: #{output_nn_forward.1} parent=0 // pred_check_branch
    %11 = sbr.rel (0) target = $region9
  $region8: #{output_nn_forward.1} parent=0 // pred_region
    _
  $region9: #{output_nn_forward.1} parent=0 // pred_fallthru
    _
  // Predicated region
  $region10: #{output_nn_forward.1} parent=0 // pred_check
    _
  $region11: #{output_nn_forward.1} parent=0 // pred_check_branch
    %13 = sbr.rel (0) target = $region13
  $region12: #{output_nn_forward.1} parent=0 // pred_region
    _
  $region13: #{output_nn_forward.1} parent=0 // pred_fallthru
    _
  %v14 = vld [vmem:[%s0] sm:$0xff]
  %v15 = vld [vmem:[%s1] sm:$0xff]
  %v16 = vld [vmem:[%s1 + $0x8] sm:$0xff]
  %v17 = vld [vmem:[%s1 + $0x10] sm:$0xff]
  %v18 = vld [vmem:[%s1 + $0x18] sm:$0xff]
  %v19 = vld [vmem:[%s1 + $0x20] sm:$0xff]
  %v20 = vld [vmem:[%s1 + $0x28] sm:$0xff]
  %v21 = vld [vmem:[%s1 + $0x30] sm:$0xff]
  %v22 = vld [vmem:[%s1 + $0x38] sm:$0xff]
  %v23 = vld [vmem:[%s1 + $0x40] sm:$0xff]
  %v24 = vld [vmem:[%s1 + $0x48] sm:$0xff]
  %v25 = vld [vmem:[%s1 + $0x50] sm:$0xff]
  %v26 = vld [vmem:[%s1 + $0x58] sm:$0xff]
  %v27 = vld [vmem:[%s1 + $0x60] sm:$0xff]
  %v28 = vld [vmem:[%s1 + $0x68] sm:$0xff]
  %v29 = vld [vmem:[%s1 + $0x70] sm:$0xff]
  %v30 = vld [vmem:[%s1 + $0x78] sm:$0xff]
  %v31 = vld [vmem:[%s2] sm:$0x1]
  %v33 = vlaneseq
  %v34 = vshrl.u32 %v33, 7
  %v35 = vsub.s32 0, %v34
  %v36 = vrot.slane %v31, %v35
  %38 = vmatprep.subr.mxu0 0.0
  %39 = vmatpush1.msra.mxu0 %v15
  %40 = vmatprep.subr.mxu0 0.0
  %41 = vmatpush1.msra.mxu0 %v16
  %42 = vmatprep.subr.mxu0 0.0
  %43 = vmatpush1.msra.mxu0 %v17
  %44 = vmatprep.subr.mxu0 0.0
  %45 = vmatpush1.msra.mxu0 %v18
  %46 = vmatprep.subr.mxu0 0.0
  %47 = vmatpush1.msra.mxu0 %v19
  %48 = vmatprep.subr.mxu0 0.0
  %49 = vmatpush1.msra.mxu0 %v20
  %50 = vmatprep.subr.mxu0 0.0
  %51 = vmatpush1.msra.mxu0 %v21
  %52 = vmatprep.subr.mxu0 0.0
  %53 = vmatpush1.msra.mxu0 %v22
  %54 = vmatprep.subr.mxu0 0.0
  %55 = vmatpush1.msra.mxu0 %v23
  %56 = vmatprep.subr.mxu0 0.0
  %57 = vmatpush1.msra.mxu0 %v24
  %58 = vmatprep.subr.mxu0 0.0
  %59 = vmatpush1.msra.mxu0 %v25
  %60 = vmatprep.subr.mxu0 0.0
  %61 = vmatpush1.msra.mxu0 %v26
  %62 = vmatprep.subr.mxu0 0.0
  %63 = vmatpush1.msra.mxu0 %v27
  %64 = vmatprep.subr.mxu0 0.0
  %65 = vmatpush1.msra.mxu0 %v28
  %66 = vmatprep.subr.mxu0 0.0
  %67 = vmatpush1.msra.mxu0 %v29
  %68 = vmatprep.subr.mxu0 0.0
  %69 = vmatpush1.msra.mxu0 %v30
  %70 = vmatprep.subr.mxu0 0.0
  %71 = vmatpush1.msra.mxu0 0.0
  %72 = vmatprep.subr.mxu0 0.0
  %73 = vmatpush1.msra.mxu0 0.0
  %74 = vmatprep.subr.mxu0 0.0
  %75 = vmatpush1.msra.mxu0 0.0
  %76 = vmatprep.subr.mxu0 0.0
  %77 = vmatpush1.msra.mxu0 0.0
  %78 = vmatprep.subr.mxu0 0.0
  %79 = vmatpush1.msra.mxu0 0.0
  %80 = vmatprep.subr.mxu0 0.0
  %81 = vmatpush1.msra.mxu0 0.0
  %82 = vmatprep.subr.mxu0 0.0
  %83 = vmatpush1.msra.mxu0 0.0
  %84 = vmatprep.subr.mxu0 0.0
  %85 = vmatpush1.msra.mxu0 0.0
  %86 = vmatprep.subr.mxu0 0.0
  %87 = vmatpush1.msra.mxu0 0.0
  %88 = vmatprep.subr.mxu0 0.0
  %89 = vmatpush1.msra.mxu0 0.0
  %90 = vmatprep.subr.mxu0 0.0
  %91 = vmatpush1.msra.mxu0 0.0
  %92 = vmatprep.subr.mxu0 0.0
  %93 = vmatpush1.msra.mxu0 0.0
  %94 = vmatprep.subr.mxu0 0.0
  %95 = vmatpush1.msra.mxu0 0.0
  %96 = vmatprep.subr.mxu0 0.0
  %97 = vmatpush1.msra.mxu0 0.0
  %98 = vmatprep.subr.mxu0 0.0
  %99 = vmatpush1.msra.mxu0 0.0
  %100 = vmatprep.subr.mxu0 0.0
  %101 = vmatpush1.msra.mxu0 0.0
  %102 = vmatprep.mubr.f32.mxu0 0.0
  %103 = vmatmul.mubr.f32.gmra.mrb[0].mxu0 %v14
  %v104 = vpop.f32.mrb[0].mxu0
  %v105 = vadd.f32 %v36, %v104
  %v106 = vpop.f32.mrb[0].mxu0
  %107 = vdwg.mxu0
  %108 = vst [vmem:[%s3] sm:$0xff] %v105
  // Predicated region
  $region14: #{output_nn_forward.1} parent=0 // pred_check
    _
  $region15: #{output_nn_forward.1} parent=0 // pred_check_branch
    %110 = sbr.rel (0) target = $region17
  $region16: #{output_nn_forward.1} parent=0 // pred_region
    _
  $region17: #{output_nn_forward.1} parent=0 // pred_fallthru
    _
  // Predicated region
  $region18: #{output_nn_forward.1} parent=0 // pred_check
    _
  $region19: #{output_nn_forward.1} parent=0 // pred_check_branch
    %112 = sbr.rel (0) target = $region21
  $region20: #{output_nn_forward.1} parent=0 // pred_region
    _
  $region21: #{output_nn_forward.1} parent=0 // pred_fallthru
    _

</llo_original>
